<compile_context>
chip_gen: v7x
topology: tpu7x:2x2x1
jax: 0.10.0
libtpu: 0.0.40
codegen_flags: <defaults>
</compile_context>

<pallas_src>
import math
from functools import partial

import jax
import jax.numpy as jnp
from jax import lax
from jax.experimental import pallas as pl
from jax.experimental.pallas import tpu as pltpu


def _round_up(x: int, m: int) -> int:
    return ((x + m - 1) // m) * m


def _dense_kernel(x_ref, w_ref, b_ref, o_ref, acc_ref):
    # x_ref: (tm, tk)   w_ref: (tn, tk)   b_ref: (1, tn)
    # o_ref: (tm, tn)   acc_ref: (tm, tn) f32 scratch (resident across k)
    k = pl.program_id(2)

    @pl.when(k == 0)
    def _():
        acc_ref[...] = jnp.zeros_like(acc_ref)

    # y[m, n] += sum_k x[m, k] * w[n, k]   (weight kept PyTorch-style (N, K))
    acc_ref[...] += lax.dot_general(
        x_ref[...],
        w_ref[...],
        dimension_numbers=(((1,), (1,)), ((), ())),
        preferred_element_type=jnp.float32,
    )

    @pl.when(k == pl.num_programs(2) - 1)
    def _():
        out = acc_ref[...] + b_ref[...].astype(jnp.float32)
        o_ref[...] = out.astype(o_ref.dtype)


def _x_index_map(i, j, kk):
    return (i, kk)


def _w_index_map(i, j, kk):
    return (j, kk)


def _b_index_map(i, j, kk):
    return (0, j)


def _o_index_map(i, j, kk):
    return (i, j)


def _pick_tiles(m: int, k: int, n: int):
    # MXU-friendly tiles, capped so tiny problems don't over-pad.
    # tm: sublane axis -> multiple of 8; tk/tn: lane axes -> multiples of 128.
    tm = min(256, _round_up(m, 8))
    tk = min(512, _round_up(k, 128))
    tn = min(256, _round_up(n, 128))
    return tm, tk, tn


@jax.jit
def dense_forward(x, weight, bias=None):
    """y = x @ weight.T + bias   (PyTorch nn.Linear semantics).

    x:      (..., in_features)
    weight: (out_features, in_features)   -- NOT transposed by the wrapper
    bias:   (out_features,) or None
    returns (..., out_features), same dtype as x.
    """
    out_features, in_features = weight.shape
    assert x.shape[-1] == in_features

    lead_shape = x.shape[:-1]
    m = int(math.prod(lead_shape)) if lead_shape else 1
    k = in_features
    n = out_features

    x2d = x.reshape(m, k)
    w = weight.astype(x.dtype)
    if bias is None:
        b = jnp.zeros((n,), dtype=x.dtype)
    else:
        b = bias.astype(x.dtype)

    tm, tk, tn = _pick_tiles(m, k, n)
    mp, kp, np_ = _round_up(m, tm), _round_up(k, tk), _round_up(n, tn)

    # Zero-pad to tile multiples (padded K contributes zero to the dot; padded
    # M rows / N cols are sliced off afterwards).
    if (mp, kp) != (m, k):
        x2d = jnp.pad(x2d, ((0, mp - m), (0, kp - k)))
    if (np_, kp) != (n, k):
        w = jnp.pad(w, ((0, np_ - n), (0, kp - k)))
    if np_ != n:
        b = jnp.pad(b, (0, np_ - n))
    b2d = b.reshape(1, np_)

    grid = (mp // tm, np_ // tn, kp // tk)

    itemsize = jnp.dtype(x.dtype).itemsize
    cost = pl.CostEstimate(
        flops=2 * m * k * n,
        transcendentals=0,
        bytes_accessed=(m * k + n * k + n + m * n) * itemsize,
    )

    y2d = pl.pallas_call(
        _dense_kernel,
        out_shape=jax.ShapeDtypeStruct((mp, np_), x.dtype),
        grid=grid,
        in_specs=[
            pl.BlockSpec((tm, tk), _x_index_map),   # x        (M, K)
            pl.BlockSpec((tn, tk), _w_index_map),   # weight   (N, K)
            pl.BlockSpec((1, tn), _b_index_map),    # bias     (1, N)
        ],
        out_specs=pl.BlockSpec((tm, tn), _o_index_map),
        scratch_shapes=[pltpu.VMEM((tm, tn), jnp.float32)],
        compiler_params=pltpu.CompilerParams(
            dimension_semantics=("parallel", "parallel", "arbitrary"),
            vmem_limit_bytes=64 * 1024 * 1024,
        ),
        cost_estimate=cost,
    )(x2d, w, b2d)

    y2d = y2d[:m, :n]
    return y2d.reshape(*lead_shape, n)


class Dense:
    """JAX/Pallas equivalent of the PyTorch Dense module (nn.Linear wrapper)."""

    def __init__(self, in_features: int, out_features: int, bias: bool = True,
                 key=None):
        if key is None:
            key = jax.random.PRNGKey(0)
        k_w, k_b = jax.random.split(key)
        # Deterministic init mirroring nn.Linear's kaiming-uniform bounds.
        bound = 1.0 / math.sqrt(in_features)
        self.weight = jax.random.uniform(
            k_w, (out_features, in_features), jnp.float32,
            minval=-bound, maxval=bound)
        if bias:
            self.bias = jax.random.uniform(
                k_b, (out_features,), jnp.float32,
                minval=-bound, maxval=bound)
        else:
            self.bias = None

    def initialize(self, initializer):
        # Mirrors Dense.initialize(initializer) from the PyTorch module:
        # initializer maps the existing weight to a new weight.
        self.weight = initializer(self.weight)

    def __call__(self, inputs):
        return dense_forward(inputs, self.weight, self.bias)


if __name__ == "__main__":
    key = jax.random.PRNGKey(0)
    k_in, k_mod = jax.random.split(key)

    batch, seq, in_features, out_features = 2, 8, 32, 64
    x = jax.random.normal(k_in, (batch, seq, in_features), jnp.float32)

    # With bias.
    layer = Dense(in_features, out_features, bias=True, key=k_mod)
    y = jax.block_until_ready(layer(x))
    y_ref = x @ layer.weight.T + layer.bias
    assert y.shape == (batch, seq, out_features)
    assert jnp.allclose(y, y_ref, atol=1e-5, rtol=1e-5)

    # Without bias (merged kernel path with zero dummy bias).
    layer_nb = Dense(in_features, out_features, bias=False, key=k_mod)
    y_nb = jax.block_until_ready(layer_nb(x))
    y_nb_ref = x @ layer_nb.weight.T
    assert jnp.allclose(y_nb, y_nb_ref, atol=1e-5, rtol=1e-5)

    print("KERNEL_OK")
</pallas_src>

<mosaic_0001>
module attributes {stable_mosaic.version = 11 : i64} {
  func.func @_dense_kernel(%arg0: i32, %arg1: i32, %arg2: i32, %arg3: memref<16x128xf32, #tpu.memory_space<vmem>>, %arg4: memref<128x128xf32, #tpu.memory_space<vmem>>, %arg5: memref<1x128xf32, #tpu.memory_space<vmem>>, %arg6: memref<16x128xf32, #tpu.memory_space<vmem>>, %arg7: memref<16x128xf32, #tpu.memory_space<vmem>>) attributes {dimension_semantics = [#tpu.dimension_semantics<parallel>, #tpu.dimension_semantics<parallel>, #tpu.dimension_semantics<arbitrary>], iteration_bounds = array<i64: 1, 1, 1>, scalar_prefetch = 0 : i64, scratch_operands = 1 : i64, tpu.core_type = #tpu.core_type<tc>, window_params = [{transform_indices = @transform_0, window_bounds = array<i64: 16, 128>}, {transform_indices = @transform_1, window_bounds = array<i64: 128, 128>}, {transform_indices = @transform_2, window_bounds = array<i64: 1, 128>}, {transform_indices = @transform_3, window_bounds = array<i64: 16, 128>}]} {
    %c0_i32 = arith.constant 0 : i32
    %0 = arith.cmpi eq, %arg2, %c0_i32 : i32
    %1 = arith.extui %0 : i1 to i32
    %c0_i32_0 = arith.constant 0 : i32
    %2 = arith.cmpi ne, %1, %c0_i32_0 : i32
    scf.if %2 {
      %cst_10 = arith.constant 0.000000e+00 : f32
      %12 = vector.broadcast %cst_10 : f32 to vector<16x128xf32>
      %c0_11 = arith.constant 0 : index
      %c0_12 = arith.constant 0 : index
      %13 = vector.load %arg7[%c0_11, %c0_12] : memref<16x128xf32, #tpu.memory_space<vmem>>, vector<16x128xf32>
      tpu.vector_store %arg7[%c0_11, %c0_12], %12 {strides = array<i32>} : memref<16x128xf32, #tpu.memory_space<vmem>>, vector<16x128xf32>,
    } else {
    }
    %c0 = arith.constant 0 : index
    %c0_1 = arith.constant 0 : index
    %3 = vector.load %arg7[%c0, %c0_1] : memref<16x128xf32, #tpu.memory_space<vmem>>, vector<16x128xf32>
    %c0_2 = arith.constant 0 : index
    %c0_3 = arith.constant 0 : index
    %4 = vector.load %arg3[%c0_2, %c0_3] : memref<16x128xf32, #tpu.memory_space<vmem>>, vector<16x128xf32>
    %c0_4 = arith.constant 0 : index
    %c0_5 = arith.constant 0 : index
    %5 = vector.load %arg4[%c0_4, %c0_5] : memref<128x128xf32, #tpu.memory_space<vmem>>, vector<128x128xf32>
    %cst = arith.constant dense<0.000000e+00> : vector<16x128xf32>
    %6 = tpu.matmul %4, %5, %cst {dimension_numbers = #tpu.dot_dimension_numbers<[1], [1], [0], [0], [0, 0, 1, 0], [], []>} : vector<16x128xf32>, vector<128x128xf32>, vector<16x128xf32> -> vector<16x128xf32>
    %7 = arith.addf %3, %6 : vector<16x128xf32>
    %c0_6 = arith.constant 0 : index
    %c0_7 = arith.constant 0 : index
    %8 = vector.load %arg7[%c0_6, %c0_7] : memref<16x128xf32, #tpu.memory_space<vmem>>, vector<16x128xf32>
    tpu.vector_store %arg7[%c0_6, %c0_7], %7 {strides = array<i32>} : memref<16x128xf32, #tpu.memory_space<vmem>>, vector<16x128xf32>,
    %c0_i32_8 = arith.constant 0 : i32
    %9 = arith.cmpi eq, %arg2, %c0_i32_8 : i32
    %10 = arith.extui %9 : i1 to i32
    %c0_i32_9 = arith.constant 0 : i32
    %11 = arith.cmpi ne, %10, %c0_i32_9 : i32
    scf.if %11 {
      %c0_10 = arith.constant 0 : index
      %c0_11 = arith.constant 0 : index
      %12 = vector.load %arg7[%c0_10, %c0_11] : memref<16x128xf32, #tpu.memory_space<vmem>>, vector<16x128xf32>
      %c0_12 = arith.constant 0 : index
      %c0_13 = arith.constant 0 : index
      %13 = vector.load %arg5[%c0_12, %c0_13] : memref<1x128xf32, #tpu.memory_space<vmem>>, vector<1x128xf32>
      %14 = vector.broadcast %13 : vector<1x128xf32> to vector<16x128xf32>
      %15 = arith.addf %12, %14 : vector<16x128xf32>
      %c0_14 = arith.constant 0 : index
      %c0_15 = arith.constant 0 : index
      %16 = vector.load %arg6[%c0_14, %c0_15] : memref<16x128xf32, #tpu.memory_space<vmem>>, vector<16x128xf32>
      tpu.vector_store %arg6[%c0_14, %c0_15], %15 {strides = array<i32>} : memref<16x128xf32, #tpu.memory_space<vmem>>, vector<16x128xf32>,
    } else {
    }
    return
  }
  func.func @transform_0(%arg0: i32, %arg1: i32, %arg2: i32) -> (i32, i32) {
    %c0_i32 = arith.constant 0 : i32
    return %arg0, %arg2 : i32, i32
  }
  func.func @transform_1(%arg0: i32, %arg1: i32, %arg2: i32) -> (i32, i32) {
    %c0_i32 = arith.constant 0 : i32
    return %arg1, %arg2 : i32, i32
  }
  func.func @transform_2(%arg0: i32, %arg1: i32, %arg2: i32) -> (i32, i32) {
    %c0_i32 = arith.constant 0 : i32
    %c0_i32_0 = arith.constant 0 : i32
    return %c0_i32, %arg1 : i32, i32
  }
  func.func @transform_3(%arg0: i32, %arg1: i32, %arg2: i32) -> (i32, i32) {
    %c0_i32 = arith.constant 0 : i32
    return %arg0, %arg1 : i32, i32
  }
}

</mosaic_0001>

<llo_original>
// kernel: dense_forward.1
$region0: #{dense_forward.1}
  #allocation0 [shape = 'u32[]', space=smem, size = 0x4, offset = 0x4, fixed_abs, tag = 'smem constant byte address 0x4 - core index']
  #allocation1 [shape = 'u32[144,128]{1,0:T(1,128)}', space=vmem, size = 0x12000, scoped, tag = 'internal scratch']
  #allocation2 [shape = 'f32[16,128]{1,0:T(8,128)}', space=vmem, size = 0x2000, scoped, tag = 'scratch operand']
  %s0 = inlined_call_operand.hbm [shape: f32[16,128], index: 0, kind: input, shape index: {}]
  %s1 = inlined_call_operand.hbm [shape: f32[128,128], index: 1, kind: input, shape index: {}]
  %s2 = inlined_call_operand.hbm [shape: f32[1,128], index: 2, kind: input, shape index: {}]
  %s3 = inlined_call_operand.hbm [shape: f32[16,128], index: 3, kind: output, shape index: {}]
  %s4 = sld [smem:[#allocation0]]
  $region42: #{dense_forward.1} parent=0
    _
  %s6 = ssub.s32 1, %s4
  %s7 = scalar_select 0, %s6, %s4
  $region1: #{dense_forward.1} parent=0
    #allocation3 [shape = 'u8[8192]{0}', space=vmem, size = 0x2000, scoped, tag = 'input window, operand 0, single buffered']
    #allocation4 [shape = 's32[1]{0}', space=sflag, size = 0x4, scoped, tag = 'scoped memory for dense_forward.1']
    #allocation5 [shape = 's32[1]{0}', space=sflag, size = 0x4, scoped, tag = 'scoped memory for dense_forward.1']
    #allocation6 [shape = 'u8[65536]{0}', space=vmem, size = 0x10000, scoped, tag = 'input window, operand 1, single buffered']
    #allocation7 [shape = 's32[1]{0}', space=sflag, size = 0x4, scoped, tag = 'scoped memory for dense_forward.1']
    #allocation8 [shape = 'u8[512]{0}', space=vmem, size = 0x400, scoped, tag = 'input window, operand 2, single buffered']
    #allocation9 [shape = 'u8[8192]{0}', space=vmem, size = 0x2000, scoped, tag = 'output window, operand 0, single buffered']
    %8 = vsyncpa [#allocation4], 0
    %9 = vsyncpa [#allocation7], 0
    %10 = vsyncpa [#allocation5], 0
    // Predicated region
    $region2: #{dense_forward.1} parent=1 // pred_check
      _
    $region3: #{dense_forward.1} parent=1 // pred_check_branch
      %12 = sbr.rel (0) target = $region5
    $region4: #{dense_forward.1} parent=1 // pred_region
      %s14 = ssub.s32 256, 256
      %15 = vsyncadd [#allocation4], %s14
      %s16 = sshll.u32 [#allocation3], 4
      %s17 = int_to_ptr.vmem [resolvable:$true] %s16
      %22 = dma.hbm_to_vmem [thread:$0]  %s0, 256, %s17, [#allocation4], 128, 128, 8
    $region5: #{dense_forward.1} parent=1 // pred_fallthru
      _
    // Predicated region
    $region6: #{dense_forward.1} parent=1 // pred_check
      _
    $region7: #{dense_forward.1} parent=1 // pred_check_branch
      %24 = sbr.rel (0) target = $region9
    $region8: #{dense_forward.1} parent=1 // pred_region
      %s26 = ssub.s32 2048, 2048
      %27 = vsyncadd [#allocation7], %s26
      %s28 = sshll.u32 [#allocation6], 4
      %s29 = int_to_ptr.vmem [resolvable:$true] %s28
      %34 = dma.hbm_to_vmem [thread:$0]  %s1, 2048, %s29, [#allocation7], 128, 128, 8
    $region9: #{dense_forward.1} parent=1 // pred_fallthru
      _
    // Predicated region
    $region10: #{dense_forward.1} parent=1 // pred_check
      _
    $region11: #{dense_forward.1} parent=1 // pred_check_branch
      %36 = sbr.rel (0) target = $region13
    $region12: #{dense_forward.1} parent=1 // pred_region
      %s38 = ssub.s32 16, 16
      %39 = vsyncadd [#allocation7], %s38
      %s41 = sshll.u32 [#allocation8], 4
      %s42 = int_to_ptr.vmem [resolvable:$true] %s41
      %44 = dma.hbm_to_vmem [thread:$0]  %s2, 16, %s42, [#allocation7]
    $region13: #{dense_forward.1} parent=1 // pred_fallthru
      _
    // Predicated region
    $region14: #{dense_forward.1} parent=1 // pred_check
      _
    $region15: #{dense_forward.1} parent=1 // pred_check_branch
      %46 = sbr.rel (0) target = $region17
    $region16: #{dense_forward.1} parent=1 // pred_region
      %47 = dma.done [#allocation4], 256
    $region17: #{dense_forward.1} parent=1 // pred_fallthru
      _
    // Predicated region
    $region18: #{dense_forward.1} parent=1 // pred_check
      _
    $region19: #{dense_forward.1} parent=1 // pred_check_branch
      %49 = sbr.rel (0) target = $region21
    $region20: #{dense_forward.1} parent=1 // pred_region
      %50 = dma.done [#allocation7], 2048
    $region21: #{dense_forward.1} parent=1 // pred_fallthru
      _
    // Predicated region
    $region22: #{dense_forward.1} parent=1 // pred_check
      _
    $region23: #{dense_forward.1} parent=1 // pred_check_branch
      %52 = sbr.rel (0) target = $region25
    $region24: #{dense_forward.1} parent=1 // pred_region
      %53 = dma.done [#allocation7], 16
    $region25: #{dense_forward.1} parent=1 // pred_fallthru
      _
    %p54 = scmp.eq.s32.totalorder 0, 0
    // Predicated region
    $region26: #{dense_forward.1} parent=1 // pred_check
      %p55 = pneg %p54
    $region27: #{dense_forward.1} parent=1 // pred_check_branch
      %57 = sbr.rel (%p55) target = $region29
    $region28: #{dense_forward.1} parent=1 // pred_region
      %58 = vst [vmem:[#allocation2] sm:$0xff] 0.0
      %59 = vst [vmem:[#allocation2 + $0x8] sm:$0xff] 0.0
    $region29: #{dense_forward.1} parent=1 // pred_fallthru
      _
    %v60 = vld [vmem:[#allocation2] sm:$0xff]
    %v61 = vld [vmem:[#allocation2 + $0x8] sm:$0xff]
    %v62 = vld [vmem:[#allocation3] sm:$0xff]
    %v63 = vld [vmem:[#allocation3 + $0x8] sm:$0xff]
    %v64 = vld [vmem:[#allocation6] sm:$0xff]
    %v65 = vld [vmem:[#allocation6 + $0x8] sm:$0xff]
    %v66 = vld [vmem:[#allocation6 + $0x10] sm:$0xff]
    %v67 = vld [vmem:[#allocation6 + $0x18] sm:$0xff]
    %v68 = vld [vmem:[#allocation6 + $0x20] sm:$0xff]
    %v69 = vld [vmem:[#allocation6 + $0x28] sm:$0xff]
    %v70 = vld [vmem:[#allocation6 + $0x30] sm:$0xff]
    %v71 = vld [vmem:[#allocation6 + $0x38] sm:$0xff]
    %v72 = vld [vmem:[#allocation6 + $0x40] sm:$0xff]
    %v73 = vld [vmem:[#allocation6 + $0x48] sm:$0xff]
    %v74 = vld [vmem:[#allocation6 + $0x50] sm:$0xff]
    %v75 = vld [vmem:[#allocation6 + $0x58] sm:$0xff]
    %v76 = vld [vmem:[#allocation6 + $0x60] sm:$0xff]
    %v77 = vld [vmem:[#allocation6 + $0x68] sm:$0xff]
    %v78 = vld [vmem:[#allocation6 + $0x70] sm:$0xff]
    %v79 = vld [vmem:[#allocation6 + $0x78] sm:$0xff]
    %80 = vmatprep.subr.mxu0 0.0
    %81 = vmatpush1.xpose.msra.mxu0 %v64
    %82 = vmatprep.subr.mxu0 0.0
    %83 = vmatpush1.xpose.msra.mxu0 %v65
    %84 = vmatprep.subr.mxu0 0.0
    %85 = vmatpush1.xpose.msra.mxu0 %v66
    %86 = vmatprep.subr.mxu0 0.0
    %87 = vmatpush1.xpose.msra.mxu0 %v67
    %88 = vmatprep.subr.mxu0 0.0
    %89 = vmatpush1.xpose.msra.mxu0 %v68
    %90 = vmatprep.subr.mxu0 0.0
    %91 = vmatpush1.xpose.msra.mxu0 %v69
    %92 = vmatprep.subr.mxu0 0.0
    %93 = vmatpush1.xpose.msra.mxu0 %v70
    %94 = vmatprep.subr.mxu0 0.0
    %95 = vmatpush1.xpose.msra.mxu0 %v71
    %96 = vmatprep.subr.mxu0 0.0
    %97 = vmatpush1.xpose.msra.mxu0 %v72
    %98 = vmatprep.subr.mxu0 0.0
    %99 = vmatpush1.xpose.msra.mxu0 %v73
    %100 = vmatprep.subr.mxu0 0.0
    %101 = vmatpush1.xpose.msra.mxu0 %v74
    %102 = vmatprep.subr.mxu0 0.0
    %103 = vmatpush1.xpose.msra.mxu0 %v75
    %104 = vmatprep.subr.mxu0 0.0
    %105 = vmatpush1.xpose.msra.mxu0 %v76
    %106 = vmatprep.subr.mxu0 0.0
    %107 = vmatpush1.xpose.msra.mxu0 %v77
    %108 = vmatprep.subr.mxu0 0.0
    %109 = vmatpush1.xpose.msra.mxu0 %v78
    %110 = vmatprep.subr.mxu0 0.0
    %111 = vmatpush1.xpose.msra.mxu0 %v79
    %112 = vmatprep.subr.mxu0 0.0
    %113 = vmatpush1.xpose.msra.mxu0 0.0
    %114 = vmatprep.subr.mxu0 0.0
    %115 = vmatpush1.xpose.msra.mxu0 0.0
    %116 = vmatprep.subr.mxu0 0.0
    %117 = vmatpush1.xpose.msra.mxu0 0.0
    %118 = vmatprep.subr.mxu0 0.0
    %119 = vmatpush1.xpose.msra.mxu0 0.0
    %120 = vmatprep.subr.mxu0 0.0
    %121 = vmatpush1.xpose.msra.mxu0 0.0
    %122 = vmatprep.subr.mxu0 0.0
    %123 = vmatpush1.xpose.msra.mxu0 0.0
    %124 = vmatprep.subr.mxu0 0.0
    %125 = vmatpush1.xpose.msra.mxu0 0.0
    %126 = vmatprep.subr.mxu0 0.0
    %127 = vmatpush1.xpose.msra.mxu0 0.0
    %128 = vmatprep.subr.mxu0 0.0
    %129 = vmatpush1.xpose.msra.mxu0 0.0
    %130 = vmatprep.subr.mxu0 0.0
    %131 = vmatpush1.xpose.msra.mxu0 0.0
    %132 = vmatprep.subr.mxu0 0.0
    %133 = vmatpush1.xpose.msra.mxu0 0.0
    %134 = vmatprep.subr.mxu0 0.0
    %135 = vmatpush1.xpose.msra.mxu0 0.0
    %136 = vmatprep.subr.mxu0 0.0
    %137 = vmatpush1.xpose.msra.mxu0 0.0
    %138 = vmatprep.subr.mxu0 0.0
    %139 = vmatpush1.xpose.msra.mxu0 0.0
    %140 = vmatprep.subr.mxu0 0.0
    %141 = vmatpush1.xpose.msra.mxu0 0.0
    %142 = vmatprep.subr.mxu0 0.0
    %143 = vmatpush1.xpose.msra.mxu0 0.0
    %144 = vmatprep.mubr.f32.mxu0 0.0
    %145 = vmatmul.mubr.f32.gmra.mrb[0].mxu0 %v62
    %v146 = vpop.f32.mrb[0].mxu0
    %v147 = vadd.f32 0.0, %v146
    %v148 = vpop.f32.mrb[0].mxu0
    %149 = vmatprep.mubr.f32.mxu0 0.0
    %150 = vmatmul.mubr.f32.gmra.mrb[0].mxu0 %v63
    %v151 = vpop.f32.mrb[0].mxu0
    %v152 = vadd.f32 0.0, %v151
    %v153 = vpop.f32.mrb[0].mxu0
    %154 = vdwg.mxu0
    %v155 = vadd.f32 %v60, %v147
    %v156 = vadd.f32 %v61, %v152
    %157 = vst [vmem:[#allocation2] sm:$0xff] %v155
    %158 = vst [vmem:[#allocation2 + $0x8] sm:$0xff] %v156
    // Predicated region
    $region30: #{dense_forward.1} parent=1 // pred_check
      %p159 = pneg %p54
    $region31: #{dense_forward.1} parent=1 // pred_check_branch
      %161 = sbr.rel (%p159) target = $region33
    $region32: #{dense_forward.1} parent=1 // pred_region
      %v162 = vld [vmem:[#allocation2] sm:$0xff]
      %v163 = vld [vmem:[#allocation2 + $0x8] sm:$0xff]
      %v164 = vld [vmem:[#allocation8] sm:$0x1]
      %v166 = vlaneseq
      %v167 = vshrl.u32 %v166, 7
      %v168 = vsub.s32 0, %v167
      %v169 = vrot.slane %v164, %v168
      %v171 = vadd.f32 %v162, %v169
      %v172 = vadd.f32 %v163, %v169
      %173 = vst [vmem:[#allocation9] sm:$0xff] %v171
      %174 = vst [vmem:[#allocation9 + $0x8] sm:$0xff] %v172
    $region33: #{dense_forward.1} parent=1 // pred_fallthru
      _
    // Predicated region
    $region34: #{dense_forward.1} parent=1 // pred_check
      _
    $region35: #{dense_forward.1} parent=1 // pred_check_branch
      %176 = sbr.rel (0) target = $region37
    $region36: #{dense_forward.1} parent=1 // pred_region
      %s178 = ssub.s32 256, 256
      %179 = vsyncadd [#allocation5], %s178
      %s180 = sshll.u32 [#allocation9], 4
      %s181 = int_to_ptr.vmem [resolvable:$true] %s180
      %186 = dma.vmem_to_hbm [thread:$0]  %s181, 256, %s3, [#allocation5], 128, 128, 8
    $region37: #{dense_forward.1} parent=1 // pred_fallthru
      _
    // Predicated region
    $region38: #{dense_forward.1} parent=1 // pred_check
      _
    $region39: #{dense_forward.1} parent=1 // pred_check_branch
      %188 = sbr.rel (0) target = $region41
    $region40: #{dense_forward.1} parent=1 // pred_region
      %189 = dma.done [#allocation5], 256
    $region41: #{dense_forward.1} parent=1 // pred_fallthru
      _
    %190 = vsyncpa [#allocation4], 1
    %191 = vsyncpa [#allocation7], 1
    %192 = vsyncpa [#allocation5], 1

</llo_original>
